<compile_context>
chip_gen: v7x
topology: tpu7x:2x2x1
jax: 0.10.0
libtpu: 0.0.40
codegen_flags: <defaults>
</compile_context>

<pallas_src>
import functools

import jax
import jax.numpy as jnp
from jax import lax
from jax.experimental import pallas as pl
from jax.experimental.pallas import tpu as pltpu

EPS = 1e-5          # BatchNorm2d default eps
NEG_SLOPE = 0.2     # LeakyReLU slope


def _stats_kernel(x_ref, w_ref, sum_ref, sq_ref):
    """Accumulate per-row (row = (o,kh,kw)) sum and sum-of-squares of the conv output."""
    @pl.when((pl.program_id(0) == 0) & (pl.program_id(1) == 0))
    def _():
        sum_ref[...] = jnp.zeros_like(sum_ref)
        sq_ref[...] = jnp.zeros_like(sq_ref)

    # (N, Cin) @ (Cin, TL) -> (N, TL); HW tile on lanes, f32 accumulation on the MXU.
    y = jnp.dot(w_ref[...], x_ref[...], preferred_element_type=jnp.float32)
    sum_ref[...] += jnp.sum(y, axis=1, keepdims=True)
    sq_ref[...] += jnp.sum(y * y, axis=1, keepdims=True)


def _norm_kernel(x_ref, w_ref, scale_ref, shift_ref, o_ref):
    """Recompute the cheap matmul and apply the fused BN affine + LeakyReLU(0.2)."""
    y = jnp.dot(w_ref[...], x_ref[...], preferred_element_type=jnp.float32)  # (N, TL)
    z = y * scale_ref[...] + shift_ref[...]                                   # per-row affine
    o_ref[...] = jnp.where(z >= 0, z, NEG_SLOPE * z).astype(o_ref.dtype)


def _pick_lane_tile(hw, cap=2048):
    """Largest multiple of 128 that divides hw (capped); fall back to the full extent."""
    cands = [t for t in range(128, min(hw, cap) + 1, 128) if hw % t == 0]
    return max(cands) if cands else hw


def leaky_relu_transpose_conv_block(x, weight, bias, gamma, beta,
                                    kernel_size=3, stride=3, eps=EPS):
    """x: (B, Cin, H, W) NCHW; weight: (Cin, Cout, KH, KW) (PyTorch ConvTranspose2d layout).

    `bias` is accepted for API parity but is mathematically redundant: training-mode
    BatchNorm subtracts the per-channel batch mean, which cancels a per-channel bias exactly.
    """
    del bias  # cancels exactly against the BN mean subtraction (training-mode BN)
    assert kernel_size == stride, "kernel exploits the non-overlapping stride==kernel case"
    B, Cin, H, W = x.shape
    Cin_w, Cout, KH, KW = weight.shape
    assert Cin_w == Cin and KH == kernel_size and KW == kernel_size
    KK = KH * KW
    N = Cout * KK                      # 72 for Cout=8, k=3  (divisible by 8 -> clean sublanes)
    HW = H * W
    TL = _pick_lane_tile(HW)           # lane tile (multiple of 128 when possible)
    n_t = HW // TL

    # Free reshape of the NCHW input -- no wrapper transpose of x.
    x_rs = x.reshape(B, Cin, HW).astype(jnp.float32)
    # Row index n = o*KK + kh*KW + kw; (N, Cin) so the matmul puts HW on the lane axis.
    w_t = jnp.transpose(weight, (1, 2, 3, 0)).reshape(N, Cin).astype(jnp.float32)

    # ---- pass A: per-row conv-output statistics (accumulated across the whole grid) ----
    stats_sum, stats_sq = pl.pallas_call(
        _stats_kernel,
        out_shape=(jax.ShapeDtypeStruct((N, 1), jnp.float32),
                   jax.ShapeDtypeStruct((N, 1), jnp.float32)),
        grid=(B, n_t),
        in_specs=[
            pl.BlockSpec((None, Cin, TL), lambda b, t: (b, 0, t)),   # x: (Cin, TL) block
            pl.BlockSpec((N, Cin), lambda b, t: (0, 0)),             # w^T resident
        ],
        out_specs=(
            pl.BlockSpec((N, 1), lambda b, t: (0, 0)),               # resident accumulators
            pl.BlockSpec((N, 1), lambda b, t: (0, 0)),
        ),
        compiler_params=pltpu.CompilerParams(
            dimension_semantics=("arbitrary", "arbitrary")),
    )(x_rs, w_t)

    # ---- tiny per-channel BN math in the wrapper (Cout-sized) ----
    count = jnp.float32(B * HW * KK)                       # = B * (3H) * (3W)
    ch_sum = stats_sum[:, 0].reshape(Cout, KK).sum(axis=1)
    ch_sq = stats_sq[:, 0].reshape(Cout, KK).sum(axis=1)
    mean = ch_sum / count
    var = ch_sq / count - mean * mean                      # biased variance (training mode)
    inv = gamma.astype(jnp.float32) * lax.rsqrt(var + eps)
    shift = beta.astype(jnp.float32) - mean * inv
    scale_rows = jnp.repeat(inv, KK).reshape(N, 1)         # per-row (o,kh,kw) affine
    shift_rows = jnp.repeat(shift, KK).reshape(N, 1)

    # ---- pass B: recompute conv per tile, fused BN affine + LeakyReLU, lane-dense store ----
    out_flat = pl.pallas_call(
        _norm_kernel,
        out_shape=jax.ShapeDtypeStruct((B, N, HW), jnp.float32),
        grid=(B, n_t),
        in_specs=[
            pl.BlockSpec((None, Cin, TL), lambda b, t: (b, 0, t)),
            pl.BlockSpec((N, Cin), lambda b, t: (0, 0)),
            pl.BlockSpec((N, 1), lambda b, t: (0, 0)),
            pl.BlockSpec((N, 1), lambda b, t: (0, 0)),
        ],
        out_specs=pl.BlockSpec((None, N, TL), lambda b, t: (b, 0, t)),
        compiler_params=pltpu.CompilerParams(
            dimension_semantics=("parallel", "parallel")),
    )(x_rs, w_t, scale_rows, shift_rows)

    # Scatter back to NCHW: (B, N, HW) -> (B, Cout, KH, KW, H, W) -> (B, Cout, 3H, 3W).
    # (Single XLA transpose of the output; in-kernel interleaving would force a <128-wide
    #  lane layout and XLU relayouts, so it is left to XLA.)
    out = out_flat.reshape(B, Cout, KH, KW, H, W)
    out = jnp.transpose(out, (0, 1, 4, 2, 5, 3)).reshape(B, Cout, H * KH, W * KW)
    return out


def _reference(x, weight, bias, gamma, beta, eps=EPS):
    """Pure-JAX reference: ConvTranspose2d(k=3,s=3) + BN(train stats) + LeakyReLU(0.2)."""
    B, Cin, H, W = x.shape
    _, Cout, KH, KW = weight.shape
    conv = jnp.einsum("bcij,cokl->boikjl", x, weight)            # (B, Cout, H, KH, W, KW)
    conv = conv.reshape(B, Cout, H * KH, W * KW) + bias[None, :, None, None]
    mean = conv.mean(axis=(0, 2, 3), keepdims=True)
    var = ((conv - mean) ** 2).mean(axis=(0, 2, 3), keepdims=True)   # biased variance
    z = (conv - mean) / jnp.sqrt(var + eps)
    z = z * gamma[None, :, None, None] + beta[None, :, None, None]
    return jnp.where(z >= 0, z, NEG_SLOPE * z)


if __name__ == "__main__":
    B, Cin, Cout, H, W, K = 2, 4, 8, 16, 16, 3

    key = jax.random.PRNGKey(0)
    kx, kw, kb, kg, kbt = jax.random.split(key, 5)
    x = jax.random.normal(kx, (B, Cin, H, W), dtype=jnp.float32)
    weight = 0.1 * jax.random.normal(kw, (Cin, Cout, K, K), dtype=jnp.float32)
    bias = 0.1 * jax.random.normal(kb, (Cout,), dtype=jnp.float32)
    gamma = 1.0 + 0.1 * jax.random.normal(kg, (Cout,), dtype=jnp.float32)
    beta = 0.1 * jax.random.normal(kbt, (Cout,), dtype=jnp.float32)

    fwd = jax.jit(functools.partial(leaky_relu_transpose_conv_block,
                                    kernel_size=K, stride=K))
    out = jax.block_until_ready(fwd(x, weight, bias, gamma, beta))

    ref = _reference(x, weight, bias, gamma, beta)
    assert out.shape == (B, Cout, H * K, W * K), out.shape
    assert jnp.allclose(out, ref, rtol=2e-3, atol=2e-3), float(jnp.max(jnp.abs(out - ref)))

    print("KERNEL_OK")
</pallas_src>

<mosaic_0001>
module attributes {stable_mosaic.version = 11 : i64} {
  func.func @_stats_kernel(%arg0: i32, %arg1: i32, %arg2: memref<1x4x256xf32, #tpu.memory_space<vmem>>, %arg3: memref<72x4xf32, #tpu.memory_space<vmem>>, %arg4: memref<72x1xf32, #tpu.memory_space<vmem>>, %arg5: memref<72x1xf32, #tpu.memory_space<vmem>>) attributes {dimension_semantics = [#tpu.dimension_semantics<arbitrary>, #tpu.dimension_semantics<arbitrary>], iteration_bounds = array<i64: 2, 1>, scalar_prefetch = 0 : i64, scratch_operands = 0 : i64, tpu.core_type = #tpu.core_type<tc>, window_params = [{transform_indices = @transform_0, window_bounds = array<i64: 1, 4, 256>}, {pipeline_mode = #tpu.pipeline_mode<synchronous>, transform_indices = @transform_1, window_bounds = array<i64: 72, 4>}, {pipeline_mode = #tpu.pipeline_mode<synchronous>, transform_indices = @transform_2, window_bounds = array<i64: 72, 1>}, {pipeline_mode = #tpu.pipeline_mode<synchronous>, transform_indices = @transform_3, window_bounds = array<i64: 72, 1>}]} {
    %c0_i32 = arith.constant 0 : i32
    %0 = arith.cmpi eq, %arg0, %c0_i32 : i32
    %c0_i32_0 = arith.constant 0 : i32
    %1 = arith.cmpi eq, %arg1, %c0_i32_0 : i32
    %2 = arith.andi %0, %1 : i1
    %3 = arith.extui %2 : i1 to i32
    %c0_i32_1 = arith.constant 0 : i32
    %4 = arith.cmpi ne, %3, %c0_i32_1 : i32
    scf.if %4 {
      %cst_16 = arith.constant 0.000000e+00 : f32
      %20 = vector.broadcast %cst_16 : f32 to vector<72x1xf32>
      %c0_17 = arith.constant 0 : index
      %c0_18 = arith.constant 0 : index
      %21 = vector.load %arg4[%c0_17, %c0_18] : memref<72x1xf32, #tpu.memory_space<vmem>>, vector<72x1xf32>
      tpu.vector_store %arg4[%c0_17, %c0_18], %20 {strides = array<i32>} : memref<72x1xf32, #tpu.memory_space<vmem>>, vector<72x1xf32>,
      %cst_19 = arith.constant 0.000000e+00 : f32
      %22 = vector.broadcast %cst_19 : f32 to vector<72x1xf32>
      %c0_20 = arith.constant 0 : index
      %c0_21 = arith.constant 0 : index
      %23 = vector.load %arg5[%c0_20, %c0_21] : memref<72x1xf32, #tpu.memory_space<vmem>>, vector<72x1xf32>
      tpu.vector_store %arg5[%c0_20, %c0_21], %22 {strides = array<i32>} : memref<72x1xf32, #tpu.memory_space<vmem>>, vector<72x1xf32>,
    } else {
    }
    %c0 = arith.constant 0 : index
    %c0_2 = arith.constant 0 : index
    %5 = vector.load %arg3[%c0, %c0_2] : memref<72x4xf32, #tpu.memory_space<vmem>>, vector<72x4xf32>
    %c0_3 = arith.constant 0 : index
    %c0_4 = arith.constant 0 : index
    %c0_5 = arith.constant 0 : index
    %6 = vector.load %arg2[%c0_3, %c0_4, %c0_5] : memref<1x4x256xf32, #tpu.memory_space<vmem>>, vector<1x4x256xf32>
    %7 = vector.shape_cast %6 : vector<1x4x256xf32> to vector<4x256xf32>
    %cst = arith.constant dense<0.000000e+00> : vector<72x256xf32>
    %8 = tpu.matmul %5, %7, %cst {dimension_numbers = #tpu.dot_dimension_numbers<[1], [0], [0], [1], [0, 0, 1, 1], [], []>} : vector<72x4xf32>, vector<4x256xf32>, vector<72x256xf32> -> vector<72x256xf32>
    %c0_6 = arith.constant 0 : index
    %c0_7 = arith.constant 0 : index
    %9 = vector.load %arg4[%c0_6, %c0_7] : memref<72x1xf32, #tpu.memory_space<vmem>>, vector<72x1xf32>
    %cst_8 = arith.constant dense<0.000000e+00> : vector<72xf32>
    %10 = vector.multi_reduction <add>, %8, %cst_8 [1] : vector<72x256xf32> to vector<72xf32>
    %11 = vector.shape_cast %10 : vector<72xf32> to vector<72x1xf32>
    %12 = arith.addf %9, %11 : vector<72x1xf32>
    %c0_9 = arith.constant 0 : index
    %c0_10 = arith.constant 0 : index
    %13 = vector.load %arg4[%c0_9, %c0_10] : memref<72x1xf32, #tpu.memory_space<vmem>>, vector<72x1xf32>
    tpu.vector_store %arg4[%c0_9, %c0_10], %12 {strides = array<i32>} : memref<72x1xf32, #tpu.memory_space<vmem>>, vector<72x1xf32>,
    %c0_11 = arith.constant 0 : index
    %c0_12 = arith.constant 0 : index
    %14 = vector.load %arg5[%c0_11, %c0_12] : memref<72x1xf32, #tpu.memory_space<vmem>>, vector<72x1xf32>
    %15 = arith.mulf %8, %8 : vector<72x256xf32>
    %cst_13 = arith.constant dense<0.000000e+00> : vector<72xf32>
    %16 = vector.multi_reduction <add>, %15, %cst_13 [1] : vector<72x256xf32> to vector<72xf32>
    %17 = vector.shape_cast %16 : vector<72xf32> to vector<72x1xf32>
    %18 = arith.addf %14, %17 : vector<72x1xf32>
    %c0_14 = arith.constant 0 : index
    %c0_15 = arith.constant 0 : index
    %19 = vector.load %arg5[%c0_14, %c0_15] : memref<72x1xf32, #tpu.memory_space<vmem>>, vector<72x1xf32>
    tpu.vector_store %arg5[%c0_14, %c0_15], %18 {strides = array<i32>} : memref<72x1xf32, #tpu.memory_space<vmem>>, vector<72x1xf32>,
    return
  }
  func.func @transform_0(%arg0: i32, %arg1: i32) -> (i32, i32, i32) {
    %c0_i32 = arith.constant 0 : i32
    %c0_i32_0 = arith.constant 0 : i32
    return %arg0, %c0_i32, %arg1 : i32, i32, i32
  }
  func.func @transform_1(%arg0: i32, %arg1: i32) -> (i32, i32) {
    %c0_i32 = arith.constant 0 : i32
    %c0_i32_0 = arith.constant 0 : i32
    %c0_i32_1 = arith.constant 0 : i32
    return %c0_i32, %c0_i32_0 : i32, i32
  }
  func.func @transform_2(%arg0: i32, %arg1: i32) -> (i32, i32) {
    %c0_i32 = arith.constant 0 : i32
    %c0_i32_0 = arith.constant 0 : i32
    %c0_i32_1 = arith.constant 0 : i32
    return %c0_i32, %c0_i32_0 : i32, i32
  }
  func.func @transform_3(%arg0: i32, %arg1: i32) -> (i32, i32) {
    %c0_i32 = arith.constant 0 : i32
    %c0_i32_0 = arith.constant 0 : i32
    %c0_i32_1 = arith.constant 0 : i32
    return %c0_i32, %c0_i32_0 : i32, i32
  }
}

module attributes {stable_mosaic.version = 11 : i64} {
  func.func @_norm_kernel(%arg0: i32, %arg1: i32, %arg2: memref<1x4x256xf32, #tpu.memory_space<vmem>>, %arg3: memref<72x4xf32, #tpu.memory_space<vmem>>, %arg4: memref<72x1xf32, #tpu.memory_space<vmem>>, %arg5: memref<72x1xf32, #tpu.memory_space<vmem>>, %arg6: memref<1x72x256xf32, #tpu.memory_space<vmem>>) attributes {dimension_semantics = [#tpu.dimension_semantics<parallel>, #tpu.dimension_semantics<parallel>], iteration_bounds = array<i64: 2, 1>, scalar_prefetch = 0 : i64, scratch_operands = 0 : i64, tpu.core_type = #tpu.core_type<tc>, window_params = [{transform_indices = @transform_0, window_bounds = array<i64: 1, 4, 256>}, {pipeline_mode = #tpu.pipeline_mode<synchronous>, transform_indices = @transform_1, window_bounds = array<i64: 72, 4>}, {pipeline_mode = #tpu.pipeline_mode<synchronous>, transform_indices = @transform_2, window_bounds = array<i64: 72, 1>}, {pipeline_mode = #tpu.pipeline_mode<synchronous>, transform_indices = @transform_3, window_bounds = array<i64: 72, 1>}, {transform_indices = @transform_4, window_bounds = array<i64: 1, 72, 256>}]} {
    %c0 = arith.constant 0 : index
    %c0_0 = arith.constant 0 : index
    %0 = vector.load %arg3[%c0, %c0_0] : memref<72x4xf32, #tpu.memory_space<vmem>>, vector<72x4xf32>
    %c0_1 = arith.constant 0 : index
    %c0_2 = arith.constant 0 : index
    %c0_3 = arith.constant 0 : index
    %1 = vector.load %arg2[%c0_1, %c0_2, %c0_3] : memref<1x4x256xf32, #tpu.memory_space<vmem>>, vector<1x4x256xf32>
    %2 = vector.shape_cast %1 : vector<1x4x256xf32> to vector<4x256xf32>
    %cst = arith.constant dense<0.000000e+00> : vector<72x256xf32>
    %3 = tpu.matmul %0, %2, %cst {dimension_numbers = #tpu.dot_dimension_numbers<[1], [0], [0], [1], [0, 0, 1, 1], [], []>} : vector<72x4xf32>, vector<4x256xf32>, vector<72x256xf32> -> vector<72x256xf32>
    %c0_4 = arith.constant 0 : index
    %c0_5 = arith.constant 0 : index
    %4 = vector.load %arg4[%c0_4, %c0_5] : memref<72x1xf32, #tpu.memory_space<vmem>>, vector<72x1xf32>
    %5 = vector.broadcast %4 : vector<72x1xf32> to vector<72x256xf32>
    %6 = arith.mulf %3, %5 : vector<72x256xf32>
    %c0_6 = arith.constant 0 : index
    %c0_7 = arith.constant 0 : index
    %7 = vector.load %arg5[%c0_6, %c0_7] : memref<72x1xf32, #tpu.memory_space<vmem>>, vector<72x1xf32>
    %8 = vector.broadcast %7 : vector<72x1xf32> to vector<72x256xf32>
    %9 = arith.addf %6, %8 : vector<72x256xf32>
    %cst_8 = arith.constant 0.000000e+00 : f32
    %10 = vector.broadcast %cst_8 : f32 to vector<72x256xf32>
    %11 = arith.cmpf oge, %9, %10 : vector<72x256xf32>
    %cst_9 = arith.constant 2.000000e-01 : f32
    %12 = vector.broadcast %cst_9 : f32 to vector<72x256xf32>
    %13 = arith.mulf %12, %9 : vector<72x256xf32>
    %14 = arith.select %11, %9, %13 : vector<72x256xi1>, vector<72x256xf32>
    %c0_10 = arith.constant 0 : index
    %c0_11 = arith.constant 0 : index
    %c0_12 = arith.constant 0 : index
    %15 = vector.load %arg6[%c0_10, %c0_11, %c0_12] : memref<1x72x256xf32, #tpu.memory_space<vmem>>, vector<1x72x256xf32>
    %16 = vector.shape_cast %15 : vector<1x72x256xf32> to vector<72x256xf32>
    %17 = vector.shape_cast %14 : vector<72x256xf32> to vector<1x72x256xf32>
    tpu.vector_store %arg6[%c0_10, %c0_11, %c0_12], %17 {strides = array<i32>} : memref<1x72x256xf32, #tpu.memory_space<vmem>>, vector<1x72x256xf32>,
    return
  }
  func.func @transform_0(%arg0: i32, %arg1: i32) -> (i32, i32, i32) {
    %c0_i32 = arith.constant 0 : i32
    %c0_i32_0 = arith.constant 0 : i32
    return %arg0, %c0_i32, %arg1 : i32, i32, i32
  }
  func.func @transform_1(%arg0: i32, %arg1: i32) -> (i32, i32) {
    %c0_i32 = arith.constant 0 : i32
    %c0_i32_0 = arith.constant 0 : i32
    %c0_i32_1 = arith.constant 0 : i32
    return %c0_i32, %c0_i32_0 : i32, i32
  }
  func.func @transform_2(%arg0: i32, %arg1: i32) -> (i32, i32) {
    %c0_i32 = arith.constant 0 : i32
    %c0_i32_0 = arith.constant 0 : i32
    %c0_i32_1 = arith.constant 0 : i32
    return %c0_i32, %c0_i32_0 : i32, i32
  }
  func.func @transform_3(%arg0: i32, %arg1: i32) -> (i32, i32) {
    %c0_i32 = arith.constant 0 : i32
    %c0_i32_0 = arith.constant 0 : i32
    %c0_i32_1 = arith.constant 0 : i32
    return %c0_i32, %c0_i32_0 : i32, i32
  }
  func.func @transform_4(%arg0: i32, %arg1: i32) -> (i32, i32, i32) {
    %c0_i32 = arith.constant 0 : i32
    %c0_i32_0 = arith.constant 0 : i32
    return %arg0, %c0_i32, %arg1 : i32, i32, i32
  }
}

</mosaic_0001>

<llo_original>
// kernel: squeeze.2
$region0: #{squeeze.2}
  %s0 = inlined_call_operand.vmem [shape: f32[72], index: 0, kind: input, shape index: {}]
  %s1 = inlined_call_operand.vmem [shape: f32[8,9], index: 1, kind: output, shape index: {}]
  $region1: #{squeeze.2} parent=0
    #allocation0 [shape = 'u8[4096]{0}', space=vmem, size = 0x1000, scoped, tag = 'scoped mem for input reshape']
    %s3 = sshllo.u32 0, 1
    %v4 = vld [vmem:[%s0] sm:%s3]
    %5 = vst [vmem:[#allocation0] sm:%s3] %v4
    %v6 = vld [vmem:[#allocation0] sm:$0x1]
    %vm7 = vcmask 72704
    %8 = vst.msk [vmem:[%s1] sm:$0x1] %vm7, %v6
    %v9 = vld [vmem:[#allocation0] sm:$0x1]
    %10 = vrot.lane.b32.xlu0 %v9, 119
    %v11 = vpop.permute.xlu0 %10
    %vm12 = vcmask 72704
    %s13 = scalar_lea.vmem %s1, 1
    %14 = vst.msk [vmem:[%s13] sm:$0x1] %vm12, %v11
    %v15 = vld [vmem:[#allocation0] sm:$0x1]
    %16 = vrot.lane.b32.xlu0 %v15, 110
    %v17 = vpop.permute.xlu0 %16
    %vm18 = vcmask 72704
    %s19 = scalar_lea.vmem %s1, 2
    %20 = vst.msk [vmem:[%s19] sm:$0x1] %vm18, %v17
    %v21 = vld [vmem:[#allocation0] sm:$0x1]
    %22 = vrot.lane.b32.xlu0 %v21, 101
    %v23 = vpop.permute.xlu0 %22
    %vm24 = vcmask 72704
    %s25 = scalar_lea.vmem %s1, 3
    %26 = vst.msk [vmem:[%s25] sm:$0x1] %vm24, %v23
    %v27 = vld [vmem:[#allocation0] sm:$0x1]
    %28 = vrot.lane.b32.xlu0 %v27, 92
    %v29 = vpop.permute.xlu0 %28
    %vm30 = vcmask 72704
    %s31 = scalar_lea.vmem %s1, 4
    %32 = vst.msk [vmem:[%s31] sm:$0x1] %vm30, %v29
    %v33 = vld [vmem:[#allocation0] sm:$0x1]
    %34 = vrot.lane.b32.xlu0 %v33, 83
    %v35 = vpop.permute.xlu0 %34
    %vm36 = vcmask 72704
    %s37 = scalar_lea.vmem %s1, 5
    %38 = vst.msk [vmem:[%s37] sm:$0x1] %vm36, %v35
    %v39 = vld [vmem:[#allocation0] sm:$0x1]
    %40 = vrot.lane.b32.xlu0 %v39, 74
    %v41 = vpop.permute.xlu0 %40
    %vm42 = vcmask 72704
    %s43 = scalar_lea.vmem %s1, 6
    %44 = vst.msk [vmem:[%s43] sm:$0x1] %vm42, %v41
    %v45 = vld [vmem:[#allocation0] sm:$0x1]
    %46 = vrot.lane.b32.xlu0 %v45, 65
    %v47 = vpop.permute.xlu0 %46
    %vm48 = vcmask 72704
    %s49 = scalar_lea.vmem %s1, 7
    %50 = vst.msk [vmem:[%s49] sm:$0x1] %vm48, %v47

// kernel: leaky_relu_transpose_conv_block.2
$region0: #{leaky_relu_transpose_conv_block.2}
  #allocation0 [shape = 'u32[]', space=smem, size = 0x4, offset = 0x4, fixed_abs, tag = 'smem constant byte address 0x4 - core index']
  #allocation1 [shape = 'u32[144,128]{1,0:T(1,128)}', space=vmem, size = 0x12000, scoped, tag = 'internal scratch']
  %s0 = inlined_call_operand.vmem [shape: f32[2,4,256], index: 0, kind: input, shape index: {}]
  %s1 = inlined_call_operand.vmem [shape: f32[72,4], index: 1, kind: input, shape index: {}]
  %s2 = inlined_call_operand.vmem [shape: f32[72,1], index: 2, kind: output, shape index: {0}]
  %s3 = inlined_call_operand.vmem [shape: f32[72,1], index: 3, kind: output, shape index: {1}]
  %4 = xla_tuple %s2, %s3
  %s5 = sld [smem:[#allocation0]]
  $region53: #{leaky_relu_transpose_conv_block.2} parent=0
    _
  %s7 = ssub.s32 1, %s5
  %s8 = scalar_select 0, %s7, %s5
  loop: start=0, step=1, limit=4
  $region2: #{leaky_relu_transpose_conv_block.2} parent=0 // loop_pre_header
    _
  $region3: #{leaky_relu_transpose_conv_block.2} parent=0 // loop_header
    %s10 = sphi 0, %s14
    %p11 = scmp.ge.s32.totalorder %s10, 4
    %s17 = sphi 0, %s29
    %s18 = sphi 0, %s25
    %s19 = sphi 0, %s17
    %s20 = sphi 0, %s18
    %s21 = sphi 0, %s19
    %s22 = sphi 0, %s20
    %s34 = sphi 0, %s36
    %s37 = sphi 0, %s34
    %s38 = sphi 0, %s37
    %s54 = sphi 0, %s38
    %s58 = sphi 0, %s58
    %s60 = sphi 0, %s58
    %s61 = sphi 0, %s60
    %s75 = sphi 0, %s61
    %s79 = sphi 0, %s79
    %s81 = sphi 0, %s79
    %s82 = sphi 0, %s81
    %s96 = sphi 0, %s82
    %s100 = sphi 0, %s100
    %s102 = sphi 0, %s100
    %s103 = sphi 0, %s102
    %s117 = sphi 0, %s103
  $region4: #{leaky_relu_transpose_conv_block.2} parent=0 // loop_header_branch
    %13 = sbr.rel (%p11) target = $region8
  $region5: #{leaky_relu_transpose_conv_block.2} parent=0 // loop_body
    %s15 = ssub.s32 %s10, 1
    %s16 = ssub.s32 %s10, 2
    %s23 = sadd.s32 1, %s18
    %p24 = scmp.ge.s32.totalorder %s23, 1
    %s25 = scalar_select %p24, 0, %s23
    %s26 = sadd.s32 1, %s17
    %s27 = scalar_select %p24, %s26, %s17
    %p28 = scmp.ge.s32.totalorder %s27, 2
    %s29 = scalar_select %p28, 0, %s27
    %s30 = ssub.s32 %s17, %s29
    %s31 = ssub.s32 %s18, %s25
    %s32 = sor.u32 %s30, %s31
    %p33 = scmp.eq.s32.totalorder %s32, 0
    %s35 = sadd.s32 %s34, 1
    %s36 = scalar_select %p33, %s34, %s35
    %p39 = pneg %p33
    %p40 = scmp.eq.s32.totalorder %s10, 1
    %p41 = por %p39, %p40
    %p42 = scmp.ne.s32.totalorder %s34, %s37
    %p43 = scmp.eq.s32.totalorder %s10, 0
    %p44 = por %p42, %p43
    %p45 = scmp.ne.s32.totalorder %s34, %s37
    %p46 = scmp.eq.s32.totalorder %s15, 1
    %p47 = por %p45, %p46
    %p48 = scmp.ne.s32.totalorder %s37, %s38
    %p49 = scmp.eq.s32.totalorder %s15, 0
    %p50 = por %p48, %p49
    %p51 = scmp.ne.s32.totalorder %s37, %s38
    %p52 = scmp.eq.s32.totalorder %s16, 1
    %p53 = por %p51, %p52
    %p55 = scmp.ne.s32.totalorder %s38, %s54
    %p56 = scmp.eq.s32.totalorder %s16, 0
    %p57 = por %p55, %p56
    %s59 = sadd.s32 %s58, 1
    %p62 = scmp.eq.s32.totalorder %s10, 1
    %p63 = scmp.ne.s32.totalorder %s58, %s60
    %p64 = scmp.eq.s32.totalorder %s10, 0
    %p65 = por %p63, %p64
    %p66 = scmp.ne.s32.totalorder %s58, %s60
    %p67 = scmp.eq.s32.totalorder %s15, 1
    %p68 = por %p66, %p67
    %p69 = scmp.ne.s32.totalorder %s60, %s61
    %p70 = scmp.eq.s32.totalorder %s15, 0
    %p71 = por %p69, %p70
    %p72 = scmp.ne.s32.totalorder %s60, %s61
    %p73 = scmp.eq.s32.totalorder %s16, 1
    %p74 = por %p72, %p73
    %p76 = scmp.ne.s32.totalorder %s61, %s75
    %p77 = scmp.eq.s32.totalorder %s16, 0
    %p78 = por %p76, %p77
    %s80 = sadd.s32 %s79, 1
    %p83 = scmp.eq.s32.totalorder %s10, 1
    %p84 = scmp.ne.s32.totalorder %s79, %s81
    %p85 = scmp.eq.s32.totalorder %s10, 0
    %p86 = por %p84, %p85
    %p87 = scmp.ne.s32.totalorder %s79, %s81
    %p88 = scmp.eq.s32.totalorder %s15, 1
    %p89 = por %p87, %p88
    %p90 = scmp.ne.s32.totalorder %s81, %s82
    %p91 = scmp.eq.s32.totalorder %s15, 0
    %p92 = por %p90, %p91
    %p93 = scmp.ne.s32.totalorder %s81, %s82
    %p94 = scmp.eq.s32.totalorder %s16, 1
    %p95 = por %p93, %p94
    %p97 = scmp.ne.s32.totalorder %s82, %s96
    %p98 = scmp.eq.s32.totalorder %s16, 0
    %p99 = por %p97, %p98
    %s101 = sadd.s32 %s100, 1
    %p104 = scmp.eq.s32.totalorder %s10, 1
    %p105 = scmp.ne.s32.totalorder %s100, %s102
    %p106 = scmp.eq.s32.totalorder %s10, 0
    %p107 = por %p105, %p106
    %p108 = scmp.ne.s32.totalorder %s100, %s102
    %p109 = scmp.eq.s32.totalorder %s15, 1
    %p110 = por %p108, %p109
    %p111 = scmp.ne.s32.totalorder %s102, %s103
    %p112 = scmp.eq.s32.totalorder %s15, 0
    %p113 = por %p111, %p112
    %p114 = scmp.ne.s32.totalorder %s102, %s103
    %p115 = scmp.eq.s32.totalorder %s16, 1
    %p116 = por %p114, %p115
    %p118 = scmp.ne.s32.totalorder %s103, %s117
    %p119 = scmp.eq.s32.totalorder %s16, 0
    %p120 = por %p118, %p119
    %p121 = scmp.le.s32.totalorder 1, %s10
    %p122 = scmp.lt.s32.totalorder %s10, 3
    %p123 = pnand %p121, %p122
    %p124 = pneg %p123
    // Predicated region
    $region9: #{leaky_relu_transpose_conv_block.2} parent=5 // pred_check
      _
    $region10: #{leaky_relu_transpose_conv_block.2} parent=5 // pred_check_branch
      %126 = sbr.rel (%p123) target = $region12
    $region11: #{leaky_relu_transpose_conv_block.2} parent=5 // pred_region
      %s127 = ssub.s32 %s10, 1
      // Predicated region
      $region13: #{leaky_relu_transpose_conv_block.2} parent=11 // pred_check
        %p128 = pneg %p71
      $region14: #{leaky_relu_transpose_conv_block.2} parent=11 // pred_check_branch
        %130 = sbr.rel (%p128) target = $region16
      $region15: #{leaky_relu_transpose_conv_block.2} parent=11 // pred_region
        _
      $region16: #{leaky_relu_transpose_conv_block.2} parent=11 // pred_fallthru
        _
    $region12: #{leaky_relu_transpose_conv_block.2} parent=5 // pred_fallthru
      _
    %p131 = scmp.lt.s32.totalorder %s10, 2
    // Predicated region
    $region17: #{leaky_relu_transpose_conv_block.2} parent=5 // pred_check
      %p132 = pneg %p131
    $region18: #{leaky_relu_transpose_conv_block.2} parent=5 // pred_check_branch
      %134 = sbr.rel (%p132) target = $region20
    $region19: #{leaky_relu_transpose_conv_block.2} parent=5 // pred_region
      // Predicated region
      $region21: #{leaky_relu_transpose_conv_block.2} parent=19 // pred_check
        %p135 = pneg %p44
      $region22: #{leaky_relu_transpose_conv_block.2} parent=19 // pred_check_branch
        %137 = sbr.rel (%p135) target = $region24
      $region23: #{leaky_relu_transpose_conv_block.2} parent=19 // pred_region
        %s138 = smul.u32 2, %s18
        %p139 = scmp.lt.s32.totalorder %s17, 1
        %s140 = scalar_select %p139, %s17, 1
        %p141 = scmp.lt.s32.totalorder %s138, 1
        %s142 = scalar_select %p141, %s138, 1
        %s143 = smul.addr %s140, 2
        %s144 = sadd.s32 %s142, %s143
        %s145 = smul.addr %s144, 4
        %s146 = scalar_lea.vmem %s0, %s145
        %s147 = smul.u32 2, %s18
      $region24: #{leaky_relu_transpose_conv_block.2} parent=19 // pred_fallthru
        _
    $region20: #{leaky_relu_transpose_conv_block.2} parent=5 // pred_fallthru
      _
    %p148 = scmp.le.s32.totalorder 1, %s10
    %p149 = scmp.lt.s32.totalorder %s10, 3
    %p150 = pnand %p148, %p149
    %p151 = pneg %p150
    // Predicated region
    $region25: #{leaky_relu_transpose_conv_block.2} parent=5 // pred_check
      _
    $region26: #{leaky_relu_transpose_conv_block.2} parent=5 // pred_check_branch
      %153 = sbr.rel (%p150) target = $region28
    $region27: #{leaky_relu_transpose_conv_block.2} parent=5 // pred_region
      %s154 = ssub.s32 %s10, 1
      %s155 = smul.u32 2, %s20
      %p156 = scmp.lt.s32.totalorder %s19, 1
      %s157 = scalar_select %p156, %s19, 1
      %p158 = scmp.lt.s32.totalorder %s155, 1
      %s159 = scalar_select %p158, %s155, 1
      %s160 = smul.addr %s157, 2
      %s161 = sadd.s32 %s159, %s160
      %s162 = smul.addr %s161, 4
      %s163 = scalar_lea.vmem %s0, %s162
      %p164 = pneg %p50
      %p165 = pneg %p47
      %p166 = pneg %p71
      %p167 = pneg %p68
      %p168 = pneg %p92
      %p169 = pneg %p89
      %p170 = pneg %p113
      %p171 = pneg %p110
      %s172 = smul.u32 2, %s20
      %p173 = scmp.lt.s32.totalorder %s19, 1
      %s174 = scalar_select %p173, %s19, 1
      %p175 = scmp.lt.s32.totalorder %s172, 1
      %s176 = scalar_select %p175, %s172, 1
      %s177 = smul.addr %s174, 2
      %s178 = sadd.s32 %s176, %s177
      %s179 = smul.addr %s178, 4
      %s180 = scalar_lea.vmem %s0, %s179
      %s181 = smul.u32 2, %s20
      %p182 = scmp.eq.s32.totalorder %s19, 0
      %p183 = scmp.eq.s32.totalorder %s20, 0
      %p184 = pnand %p182, %p183
      %p185 = pneg %p184
      // Predicated region
      $region29: #{leaky_relu_transpose_conv_block.2} parent=27 // pred_check
        _
      $region30: #{leaky_relu_transpose_conv_block.2} parent=27 // pred_check_branch
        %187 = sbr.rel (%p184) target = $region32
      $region31: #{leaky_relu_transpose_conv_block.2} parent=27 // pred_region
        %vm188 = vcmask 7168
        %189 = vst.msk [vmem:[%s2] sm:$0xff] %vm188, 0.0
        %190 = vst.msk [vmem:[%s2 + $0x8] sm:$0xff] %vm188, 0.0
        %191 = vst.msk [vmem:[%s2 + $0x10] sm:$0xff] %vm188, 0.0
        %192 = vst.msk [vmem:[%s2 + $0x18] sm:$0xff] %vm188, 0.0
        %193 = vst.msk [vmem:[%s2 + $0x20] sm:$0xff] %vm188, 0.0
        %194 = vst.msk [vmem:[%s2 + $0x28] sm:$0xff] %vm188, 0.0
        %195 = vst.msk [vmem:[%s2 + $0x30] sm:$0xff] %vm188, 0.0
        %196 = vst.msk [vmem:[%s2 + $0x38] sm:$0xff] %vm188, 0.0
        %197 = vst.msk [vmem:[%s2 + $0x40] sm:$0xff] %vm188, 0.0
        %198 = vst.msk [vmem:[%s3] sm:$0xff] %vm188, 0.0
        %199 = vst.msk [vmem:[%s3 + $0x8] sm:$0xff] %vm188, 0.0
        %200 = vst.msk [vmem:[%s3 + $0x10] sm:$0xff] %vm188, 0.0
        %201 = vst.msk [vmem:[%s3 + $0x18] sm:$0xff] %vm188, 0.0
        %202 = vst.msk [vmem:[%s3 + $0x20] sm:$0xff] %vm188, 0.0
        %203 = vst.msk [vmem:[%s3 + $0x28] sm:$0xff] %vm188, 0.0
        %204 = vst.msk [vmem:[%s3 + $0x30] sm:$0xff] %vm188, 0.0
        %205 = vst.msk [vmem:[%s3 + $0x38] sm:$0xff] %vm188, 0.0
        %206 = vst.msk [vmem:[%s3 + $0x40] sm:$0xff] %vm188, 0.0
      $region32: #{leaky_relu_transpose_conv_block.2} parent=27 // pred_fallthru
        _
      %v207 = vld [vmem:[%s1] sm:$0xff]
      %v208 = vld [vmem:[%s1 + $0x8] sm:$0xff]
      %v209 = vld [vmem:[%s1 + $0x10] sm:$0xff]
      %v210 = vld [vmem:[%s1 + $0x18] sm:$0xff]
      %v211 = vld [vmem:[%s1 + $0x20] sm:$0xff]
      %v212 = vld [vmem:[%s1 + $0x28] sm:$0xff]
      %v213 = vld [vmem:[%s1 + $0x30] sm:$0xff]
      %v214 = vld [vmem:[%s1 + $0x38] sm:$0xff]
      %v215 = vld [vmem:[%s1 + $0x40] sm:$0xff]
      %v216 = vld [vmem:[%s180] sm:$0xff]
      %v218 = vcombine.high %v216, %v216
      %vm219 = vcmask 31744
      %v221 = vsel %vm219, %v207, 0
      %v224 = vsel %vm219, %v208, 0
      %v227 = vsel %vm219, %v209, 0
      %v230 = vsel %vm219, %v210, 0
      %v233 = vsel %vm219, %v211, 0
      %v236 = vsel %vm219, %v212, 0
      %v239 = vsel %vm219, %v213, 0
      %v242 = vsel %vm219, %v214, 0
      %v245 = vsel %vm219, %v215, 0
      %vm247 = vcmask 1043456
      %v248 = vsel %vm247, %v216, 0
      %v250 = vsel %vm247, %v218, 0
      %252 = vmatprep.subr.mxu0 %v250
      %253 = vmatpush1.msra.mxu0 %v248
      %254 = vmatprep.subr.mxu0 0.0
      %255 = vmatpush1.msra.mxu0 0.0
      %256 = vmatprep.subr.mxu0 0.0
      %257 = vmatpush1.msra.mxu0 0.0
      %258 = vmatprep.subr.mxu0 0.0
      %259 = vmatpush1.msra.mxu0 0.0
      %260 = vmatprep.subr.mxu0 0.0
      %261 = vmatpush1.msra.mxu0 0.0
      %262 = vmatprep.subr.mxu0 0.0
      %263 = vmatpush1.msra.mxu0 0.0
      %264 = vmatprep.subr.mxu0 0.0
      %265 = vmatpush1.msra.mxu0 0.0
      %266 = vmatprep.subr.mxu0 0.0
      %267 = vmatpush1.msra.mxu0 0.0
      %268 = vmatprep.subr.mxu0 0.0
      %269 = vmatpush1.msra.mxu0 0.0
      %270 = vmatprep.subr.mxu0 0.0
      %271 = vmatpush1.msra.mxu0 0.0
      %272 = vmatprep.subr.mxu0 0.0
      %273 = vmatpush1.msra.mxu0 0.0
      %274 = vmatprep.subr.mxu0 0.0
      %275 = vmatpush1.msra.mxu0 0.0
      %276 = vmatprep.subr.mxu0 0.0
      %277 = vmatpush1.msra.mxu0 0.0
      %278 = vmatprep.subr.mxu0 0.0
      %279 = vmatpush1.msra.mxu0 0.0
      %280 = vmatprep.subr.mxu0 0.0
      %281 = vmatpush1.msra.mxu0 0.0
      %282 = vmatprep.subr.mxu0 0.0
      %283 = vmatpush1.msra.mxu0 0.0
      %284 = vmatprep.subr.mxu0 0.0
      %285 = vmatpush1.msra.mxu0 0.0
      %286 = vmatprep.subr.mxu0 0.0
      %287 = vmatpush1.msra.mxu0 0.0
      %288 = vmatprep.subr.mxu0 0.0
      %289 = vmatpush1.msra.mxu0 0.0
      %290 = vmatprep.subr.mxu0 0.0
      %291 = vmatpush1.msra.mxu0 0.0
      %292 = vmatprep.subr.mxu0 0.0
      %293 = vmatpush1.msra.mxu0 0.0
      %294 = vmatprep.subr.mxu0 0.0
      %295 = vmatpush1.msra.mxu0 0.0
      %296 = vmatprep.subr.mxu0 0.0
      %297 = vmatpush1.msra.mxu0 0.0
      %298 = vmatprep.subr.mxu0 0.0
      %299 = vmatpush1.msra.mxu0 0.0
      %300 = vmatprep.subr.mxu0 0.0
      %301 = vmatpush1.msra.mxu0 0.0
      %302 = vmatprep.subr.mxu0 0.0
      %303 = vmatpush1.msra.mxu0 0.0
      %304 = vmatprep.subr.mxu0 0.0
      %305 = vmatpush1.msra.mxu0 0.0
      %306 = vmatprep.subr.mxu0 0.0
      %307 = vmatpush1.msra.mxu0 0.0
      %308 = vmatprep.subr.mxu0 0.0
      %309 = vmatpush1.msra.mxu0 0.0
      %310 = vmatprep.subr.mxu0 0.0
      %311 = vmatpush1.msra.mxu0 0.0
      %312 = vmatprep.subr.mxu0 0.0
      %313 = vmatpush1.msra.mxu0 0.0
      %314 = vmatprep.subr.mxu0 0.0
      %315 = vmatpush1.msra.mxu0 0.0
      %316 = vmatprep.mubr.f32.mxu0 0.0
      %317 = vmatmul.mubr.f32.gmra.mrb[0].mxu0 %v221
      %v318 = vpop.f32.mrb[0].mxu0
      %v319 = vadd.f32 0.0, %v318
      %v320 = vpop.f32.mrb[0].mxu0
      %v321 = vadd.f32 0.0, %v320
      %322 = vmatprep.mubr.f32.mxu0 0.0
      %323 = vmatmul.mubr.f32.gmra.mrb[0].mxu0 %v224
      %v324 = vpop.f32.mrb[0].mxu0
      %v325 = vadd.f32 0.0, %v324
      %v326 = vpop.f32.mrb[0].mxu0
      %v327 = vadd.f32 0.0, %v326
      %328 = vmatprep.mubr.f32.mxu0 0.0
      %329 = vmatmul.mubr.f32.gmra.mrb[0].mxu0 %v227
      %v330 = vpop.f32.mrb[0].mxu0
      %v331 = vadd.f32 0.0, %v330
      %v332 = vpop.f32.mrb[0].mxu0
      %v333 = vadd.f32 0.0, %v332
      %334 = vmatprep.mubr.f32.mxu0 0.0
      %335 = vmatmul.mubr.f32.gmra.mrb[0].mxu0 %v230
      %v336 = vpop.f32.mrb[0].mxu0
      %v337 = vadd.f32 0.0, %v336
      %v338 = vpop.f32.mrb[0].mxu0
      %v339 = vadd.f32 0.0, %v338
      %340 = vmatprep.mubr.f32.mxu0 0.0
      %341 = vmatmul.mubr.f32.gmra.mrb[0].mxu0 %v233
      %v342 = vpop.f32.mrb[0].mxu0
      %v343 = vadd.f32 0.0, %v342
      %v344 = vpop.f32.mrb[0].mxu0
      %v345 = vadd.f32 0.0, %v344
      %346 = vmatprep.mubr.f32.mxu0 0.0
      %347 = vmatmul.mubr.f32.gmra.mrb[0].mxu0 %v236
      %v348 = vpop.f32.mrb[0].mxu0
      %v349 = vadd.f32 0.0, %v348
      %v350 = vpop.f32.mrb[0].mxu0
      %v351 = vadd.f32 0.0, %v350
      %352 = vmatprep.mubr.f32.mxu0 0.0
      %353 = vmatmul.mubr.f32.gmra.mrb[0].mxu0 %v239
      %v354 = vpop.f32.mrb[0].mxu0
      %v355 = vadd.f32 0.0, %v354
      %v356 = vpop.f32.mrb[0].mxu0
      %v357 = vadd.f32 0.0, %v356
      %358 = vmatprep.mubr.f32.mxu0 0.0
      %359 = vmatmul.mubr.f32.gmra.mrb[0].mxu0 %v242
      %v360 = vpop.f32.mrb[0].mxu0
      %v361 = vadd.f32 0.0, %v360
      %v362 = vpop.f32.mrb[0].mxu0
      %v363 = vadd.f32 0.0, %v362
      %364 = vmatprep.mubr.f32.mxu0 0.0
      %365 = vmatmul.mubr.f32.gmra.mrb[0].mxu0 %v245
      %v366 = vpop.f32.mrb[0].mxu0
      %v367 = vadd.f32 0.0, %v366
      %v368 = vpop.f32.mrb[0].mxu0
      %v369 = vadd.f32 0.0, %v368
      %370 = vdwg.mxu0
      %v371 = vld [vmem:[%s2] sm:$0xff]
      %v372 = vld [vmem:[%s2 + $0x8] sm:$0xff]
      %v373 = vld [vmem:[%s2 + $0x10] sm:$0xff]
      %v374 = vld [vmem:[%s2 + $0x18] sm:$0xff]
      %v375 = vld [vmem:[%s2 + $0x20] sm:$0xff]
      %v376 = vld [vmem:[%s2 + $0x28] sm:$0xff]
      %v377 = vld [vmem:[%s2 + $0x30] sm:$0xff]
      %v378 = vld [vmem:[%s2 + $0x38] sm:$0xff]
      %v379 = vld [vmem:[%s2 + $0x40] sm:$0xff]
      %v380 = vadd.f32 %v319, %v321
      %381 = vadd.xlane.f32.xlu0 %v380
      %v382 = vpop.xlane.xlu0 %381
      %v383 = vadd.f32 %v325, %v327
      %384 = vadd.xlane.f32.xlu0 %v383
      %v385 = vpop.xlane.xlu0 %384
      %v386 = vadd.f32 %v331, %v333
      %387 = vadd.xlane.f32.xlu0 %v386
      %v388 = vpop.xlane.xlu0 %387
      %v389 = vadd.f32 %v337, %v339
      %390 = vadd.xlane.f32.xlu0 %v389
      %v391 = vpop.xlane.xlu0 %390
      %v392 = vadd.f32 %v343, %v345
      %393 = vadd.xlane.f32.xlu0 %v392
      %v394 = vpop.xlane.xlu0 %393
      %v395 = vadd.f32 %v349, %v351
      %396 = vadd.xlane.f32.xlu0 %v395
      %v397 = vpop.xlane.xlu0 %396
      %v398 = vadd.f32 %v355, %v357
      %399 = vadd.xlane.f32.xlu0 %v398
      %v400 = vpop.xlane.xlu0 %399
      %v401 = vadd.f32 %v361, %v363
      %402 = vadd.xlane.f32.xlu0 %v401
      %v403 = vpop.xlane.xlu0 %402
      %v404 = vadd.f32 %v367, %v369
      %405 = vadd.xlane.f32.xlu0 %v404
      %v406 = vpop.xlane.xlu0 %405
      %v407 = vadd.f32 %v371, %v382
      %v408 = vadd.f32 %v372, %v385
      %v409 = vadd.f32 %v373, %v388
      %v410 = vadd.f32 %v374, %v391
      %v411 = vadd.f32 %v375, %v394
      %v412 = vadd.f32 %v376, %v397
      %v413 = vadd.f32 %v377, %v400
      %v414 = vadd.f32 %v378, %v403
      %v415 = vadd.f32 %v379, %v406
      %vm416 = vcmask 7168
      %417 = vst.msk [vmem:[%s2] sm:$0xff] %vm416, %v407
      %418 = vst.msk [vmem:[%s2 + $0x8] sm:$0xff] %vm416, %v408
      %419 = vst.msk [vmem:[%s2 + $0x10] sm:$0xff] %vm416, %v409
      %420 = vst.msk [vmem:[%s2 + $0x18] sm:$0xff] %vm416, %v410
      %421 = vst.msk [vmem:[%s2 + $0x20] sm:$0xff] %vm416, %v411
      %422 = vst.msk [vmem:[%s2 + $0x28] sm:$0xff] %vm416, %v412
      %423 = vst.msk [vmem:[%s2 + $0x30] sm:$0xff] %vm416, %v413
      %424 = vst.msk [vmem:[%s2 + $0x38] sm:$0xff] %vm416, %v414
      %425 = vst.msk [vmem:[%s2 + $0x40] sm:$0xff] %vm416, %v415
      %v426 = vld [vmem:[%s3] sm:$0xff]
      %v427 = vld [vmem:[%s3 + $0x8] sm:$0xff]
      %v428 = vld [vmem:[%s3 + $0x10] sm:$0xff]
      %v429 = vld [vmem:[%s3 + $0x18] sm:$0xff]
      %v430 = vld [vmem:[%s3 + $0x20] sm:$0xff]
      %v431 = vld [vmem:[%s3 + $0x28] sm:$0xff]
      %v432 = vld [vmem:[%s3 + $0x30] sm:$0xff]
      %v433 = vld [vmem:[%s3 + $0x38] sm:$0xff]
      %v434 = vld [vmem:[%s3 + $0x40] sm:$0xff]
      %v435 = vmul.f32 %v319, %v319
      %v436 = vmul.f32 %v321, %v321
      %v437 = vmul.f32 %v325, %v325
      %v438 = vmul.f32 %v327, %v327
      %v439 = vmul.f32 %v331, %v331
      %v440 = vmul.f32 %v333, %v333
      %v441 = vmul.f32 %v337, %v337
      %v442 = vmul.f32 %v339, %v339
      %v443 = vmul.f32 %v343, %v343
      %v444 = vmul.f32 %v345, %v345
      %v445 = vmul.f32 %v349, %v349
      %v446 = vmul.f32 %v351, %v351
      %v447 = vmul.f32 %v355, %v355
      %v448 = vmul.f32 %v357, %v357
      %v449 = vmul.f32 %v361, %v361
      %v450 = vmul.f32 %v363, %v363
      %v451 = vmul.f32 %v367, %v367
      %v452 = vmul.f32 %v369, %v369
      %v453 = vadd.f32 %v435, %v436
      %454 = vadd.xlane.f32.xlu0 %v453
      %v455 = vpop.xlane.xlu0 %454
      %v456 = vadd.f32 %v437, %v438
      %457 = vadd.xlane.f32.xlu0 %v456
      %v458 = vpop.xlane.xlu0 %457
      %v459 = vadd.f32 %v439, %v440
      %460 = vadd.xlane.f32.xlu0 %v459
      %v461 = vpop.xlane.xlu0 %460
      %v462 = vadd.f32 %v441, %v442
      %463 = vadd.xlane.f32.xlu0 %v462
      %v464 = vpop.xlane.xlu0 %463
      %v465 = vadd.f32 %v443, %v444
      %466 = vadd.xlane.f32.xlu0 %v465
      %v467 = vpop.xlane.xlu0 %466
      %v468 = vadd.f32 %v445, %v446
      %469 = vadd.xlane.f32.xlu0 %v468
      %v470 = vpop.xlane.xlu0 %469
      %v471 = vadd.f32 %v447, %v448
      %472 = vadd.xlane.f32.xlu0 %v471
      %v473 = vpop.xlane.xlu0 %472
      %v474 = vadd.f32 %v449, %v450
      %475 = vadd.xlane.f32.xlu0 %v474
      %v476 = vpop.xlane.xlu0 %475
      %v477 = vadd.f32 %v451, %v452
      %478 = vadd.xlane.f32.xlu0 %v477
      %v479 = vpop.xlane.xlu0 %478
      %v480 = vadd.f32 %v426, %v455
      %v481 = vadd.f32 %v427, %v458
      %v482 = vadd.f32 %v428, %v461
      %v483 = vadd.f32 %v429, %v464
      %v484 = vadd.f32 %v430, %v467
      %v485 = vadd.f32 %v431, %v470
      %v486 = vadd.f32 %v432, %v473
      %v487 = vadd.f32 %v433, %v476
      %v488 = vadd.f32 %v434, %v479
      %489 = vst.msk [vmem:[%s3] sm:$0xff] %vm416, %v480
      %490 = vst.msk [vmem:[%s3 + $0x8] sm:$0xff] %vm416, %v481
      %491 = vst.msk [vmem:[%s3 + $0x10] sm:$0xff] %vm416, %v482
      %492 = vst.msk [vmem:[%s3 + $0x18] sm:$0xff] %vm416, %v483
      %493 = vst.msk [vmem:[%s3 + $0x20] sm:$0xff] %vm416, %v484
      %494 = vst.msk [vmem:[%s3 + $0x28] sm:$0xff] %vm416, %v485
      %495 = vst.msk [vmem:[%s3 + $0x30] sm:$0xff] %vm416, %v486
      %496 = vst.msk [vmem:[%s3 + $0x38] sm:$0xff] %vm416, %v487
      %497 = vst.msk [vmem:[%s3 + $0x40] sm:$0xff] %vm416, %v488
      // Predicated region
      $region33: #{leaky_relu_transpose_conv_block.2} parent=27 // pred_check
        %p498 = pneg %p89
      $region34: #{leaky_relu_transpose_conv_block.2} parent=27 // pred_check_branch
        %500 = sbr.rel (%p498) target = $region36
      $region35: #{leaky_relu_transpose_conv_block.2} parent=27 // pred_region
        _
      $region36: #{leaky_relu_transpose_conv_block.2} parent=27 // pred_fallthru
        _
      // Predicated region
      $region37: #{leaky_relu_transpose_conv_block.2} parent=27 // pred_check
        %p501 = pneg %p110
      $region38: #{leaky_relu_transpose_conv_block.2} parent=27 // pred_check_branch
        %503 = sbr.rel (%p501) target = $region40
      $region39: #{leaky_relu_transpose_conv_block.2} parent=27 // pred_region
        _
      $region40: #{leaky_relu_transpose_conv_block.2} parent=27 // pred_fallthru
        _
      // Predicated region
      $region41: #{leaky_relu_transpose_conv_block.2} parent=27 // pred_check
        %p504 = pneg %p89
      $region42: #{leaky_relu_transpose_conv_block.2} parent=27 // pred_check_branch
        %506 = sbr.rel (%p504) target = $region44
      $region43: #{leaky_relu_transpose_conv_block.2} parent=27 // pred_region
        _
      $region44: #{leaky_relu_transpose_conv_block.2} parent=27 // pred_fallthru
        _
      // Predicated region
      $region45: #{leaky_relu_transpose_conv_block.2} parent=27 // pred_check
        %p507 = pneg %p110
      $region46: #{leaky_relu_transpose_conv_block.2} parent=27 // pred_check_branch
        %509 = sbr.rel (%p507) target = $region48
      $region47: #{leaky_relu_transpose_conv_block.2} parent=27 // pred_region
        _
      $region48: #{leaky_relu_transpose_conv_block.2} parent=27 // pred_fallthru
        _
    $region28: #{leaky_relu_transpose_conv_block.2} parent=5 // pred_fallthru
      _
    %p510 = scmp.le.s32.totalorder 2, %s10
    // Predicated region
    $region49: #{leaky_relu_transpose_conv_block.2} parent=5 // pred_check
      %p511 = pneg %p510
    $region50: #{leaky_relu_transpose_conv_block.2} parent=5 // pred_check_branch
      %513 = sbr.rel (%p511) target = $region52
    $region51: #{leaky_relu_transpose_conv_block.2} parent=5 // pred_region
      %s514 = ssub.s32 %s10, 2
    $region52: #{leaky_relu_transpose_conv_block.2} parent=5 // pred_fallthru
      _
  $region6: #{leaky_relu_transpose_conv_block.2} parent=0 // loop_footer
    %s14 = sadd.s32 1, %s10
  $region7: #{leaky_relu_transpose_conv_block.2} parent=0 // loop_footer_branch
    %9 = sbr.rel target = $region3
  $region8: #{leaky_relu_transpose_conv_block.2} parent=0 // loop_exit
    _

// kernel: leaky_relu_transpose_conv_block.3
$region0: #{leaky_relu_transpose_conv_block.3}
  #allocation0 [shape = 'u32[]', space=smem, size = 0x4, offset = 0x4, fixed_abs, tag = 'smem constant byte address 0x4 - core index']
  #allocation1 [shape = 'u32[144,128]{1,0:T(1,128)}', space=vmem, size = 0x12000, scoped, tag = 'internal scratch']
  %s0 = inlined_call_operand.vmem [shape: f32[2,4,256], index: 0, kind: input, shape index: {}]
  %s1 = inlined_call_operand.vmem [shape: f32[72,4], index: 1, kind: input, shape index: {}]
  %s2 = inlined_call_operand.vmem [shape: f32[72,1], index: 2, kind: input, shape index: {}]
  %s3 = inlined_call_operand.vmem [shape: f32[72,1], index: 3, kind: input, shape index: {}]
  %s4 = inlined_call_operand.vmem [shape: f32[2,72,256], index: 4, kind: output, shape index: {}]
  %s5 = sld [smem:[#allocation0]]
  $region49: #{leaky_relu_transpose_conv_block.3} parent=0
    _
  %s7 = ssub.s32 1, %s5
  %s8 = scalar_select 0, %s7, %s5
  loop: start=0, step=1, limit=4
  $region2: #{leaky_relu_transpose_conv_block.3} parent=0 // loop_pre_header
    _
  $region3: #{leaky_relu_transpose_conv_block.3} parent=0 // loop_header
    %s10 = sphi 0, %s14
    %p11 = scmp.ge.s32.totalorder %s10, 4
    %s17 = sphi 0, %s29
    %s18 = sphi 0, %s25
    %s19 = sphi 0, %s17
    %s20 = sphi 0, %s18
    %s21 = sphi 0, %s19
    %s22 = sphi 0, %s20
    %s34 = sphi 0, %s36
    %s37 = sphi 0, %s34
    %s38 = sphi 0, %s37
    %s54 = sphi 0, %s38
    %s58 = sphi 0, %s58
    %s60 = sphi 0, %s58
    %s61 = sphi 0, %s60
    %s75 = sphi 0, %s61
    %s79 = sphi 0, %s79
    %s81 = sphi 0, %s79
    %s82 = sphi 0, %s81
    %s96 = sphi 0, %s82
    %s100 = sphi 0, %s100
    %s102 = sphi 0, %s100
    %s103 = sphi 0, %s102
    %s117 = sphi 0, %s103
    %s125 = sphi 0, %s127
    %s128 = sphi 0, %s125
    %s129 = sphi 0, %s128
    %s145 = sphi 0, %s129
  $region4: #{leaky_relu_transpose_conv_block.3} parent=0 // loop_header_branch
    %13 = sbr.rel (%p11) target = $region8
  $region5: #{leaky_relu_transpose_conv_block.3} parent=0 // loop_body
    %s15 = ssub.s32 %s10, 1
    %s16 = ssub.s32 %s10, 2
    %s23 = sadd.s32 1, %s18
    %p24 = scmp.ge.s32.totalorder %s23, 1
    %s25 = scalar_select %p24, 0, %s23
    %s26 = sadd.s32 1, %s17
    %s27 = scalar_select %p24, %s26, %s17
    %p28 = scmp.ge.s32.totalorder %s27, 2
    %s29 = scalar_select %p28, 0, %s27
    %s30 = ssub.s32 %s17, %s29
    %s31 = ssub.s32 %s18, %s25
    %s32 = sor.u32 %s30, %s31
    %p33 = scmp.eq.s32.totalorder %s32, 0
    %s35 = sadd.s32 %s34, 1
    %s36 = scalar_select %p33, %s34, %s35
    %p39 = pneg %p33
    %p40 = scmp.eq.s32.totalorder %s10, 1
    %p41 = por %p39, %p40
    %p42 = scmp.ne.s32.totalorder %s34, %s37
    %p43 = scmp.eq.s32.totalorder %s10, 0
    %p44 = por %p42, %p43
    %p45 = scmp.ne.s32.totalorder %s34, %s37
    %p46 = scmp.eq.s32.totalorder %s15, 1
    %p47 = por %p45, %p46
    %p48 = scmp.ne.s32.totalorder %s37, %s38
    %p49 = scmp.eq.s32.totalorder %s15, 0
    %p50 = por %p48, %p49
    %p51 = scmp.ne.s32.totalorder %s37, %s38
    %p52 = scmp.eq.s32.totalorder %s16, 1
    %p53 = por %p51, %p52
    %p55 = scmp.ne.s32.totalorder %s38, %s54
    %p56 = scmp.eq.s32.totalorder %s16, 0
    %p57 = por %p55, %p56
    %s59 = sadd.s32 %s58, 1
    %p62 = scmp.eq.s32.totalorder %s10, 1
    %p63 = scmp.ne.s32.totalorder %s58, %s60
    %p64 = scmp.eq.s32.totalorder %s10, 0
    %p65 = por %p63, %p64
    %p66 = scmp.ne.s32.totalorder %s58, %s60
    %p67 = scmp.eq.s32.totalorder %s15, 1
    %p68 = por %p66, %p67
    %p69 = scmp.ne.s32.totalorder %s60, %s61
    %p70 = scmp.eq.s32.totalorder %s15, 0
    %p71 = por %p69, %p70
    %p72 = scmp.ne.s32.totalorder %s60, %s61
    %p73 = scmp.eq.s32.totalorder %s16, 1
    %p74 = por %p72, %p73
    %p76 = scmp.ne.s32.totalorder %s61, %s75
    %p77 = scmp.eq.s32.totalorder %s16, 0
    %p78 = por %p76, %p77
    %s80 = sadd.s32 %s79, 1
    %p83 = scmp.eq.s32.totalorder %s10, 1
    %p84 = scmp.ne.s32.totalorder %s79, %s81
    %p85 = scmp.eq.s32.totalorder %s10, 0
    %p86 = por %p84, %p85
    %p87 = scmp.ne.s32.totalorder %s79, %s81
    %p88 = scmp.eq.s32.totalorder %s15, 1
    %p89 = por %p87, %p88
    %p90 = scmp.ne.s32.totalorder %s81, %s82
    %p91 = scmp.eq.s32.totalorder %s15, 0
    %p92 = por %p90, %p91
    %p93 = scmp.ne.s32.totalorder %s81, %s82
    %p94 = scmp.eq.s32.totalorder %s16, 1
    %p95 = por %p93, %p94
    %p97 = scmp.ne.s32.totalorder %s82, %s96
    %p98 = scmp.eq.s32.totalorder %s16, 0
    %p99 = por %p97, %p98
    %s101 = sadd.s32 %s100, 1
    %p104 = scmp.eq.s32.totalorder %s10, 1
    %p105 = scmp.ne.s32.totalorder %s100, %s102
    %p106 = scmp.eq.s32.totalorder %s10, 0
    %p107 = por %p105, %p106
    %p108 = scmp.ne.s32.totalorder %s100, %s102
    %p109 = scmp.eq.s32.totalorder %s15, 1
    %p110 = por %p108, %p109
    %p111 = scmp.ne.s32.totalorder %s102, %s103
    %p112 = scmp.eq.s32.totalorder %s15, 0
    %p113 = por %p111, %p112
    %p114 = scmp.ne.s32.totalorder %s102, %s103
    %p115 = scmp.eq.s32.totalorder %s16, 1
    %p116 = por %p114, %p115
    %p118 = scmp.ne.s32.totalorder %s103, %s117
    %p119 = scmp.eq.s32.totalorder %s16, 0
    %p120 = por %p118, %p119
    %s121 = ssub.s32 %s17, %s29
    %s122 = ssub.s32 %s18, %s25
    %s123 = sor.u32 %s121, %s122
    %p124 = scmp.eq.s32.totalorder %s123, 0
    %s126 = sadd.s32 %s125, 1
    %s127 = scalar_select %p124, %s125, %s126
    %p130 = pneg %p124
    %p131 = scmp.eq.s32.totalorder %s10, 1
    %p132 = por %p130, %p131
    %p133 = scmp.ne.s32.totalorder %s125, %s128
    %p134 = scmp.eq.s32.totalorder %s10, 0
    %p135 = por %p133, %p134
    %p136 = scmp.ne.s32.totalorder %s125, %s128
    %p137 = scmp.eq.s32.totalorder %s15, 1
    %p138 = por %p136, %p137
    %p139 = scmp.ne.s32.totalorder %s128, %s129
    %p140 = scmp.eq.s32.totalorder %s15, 0
    %p141 = por %p139, %p140
    %p142 = scmp.ne.s32.totalorder %s128, %s129
    %p143 = scmp.eq.s32.totalorder %s16, 1
    %p144 = por %p142, %p143
    %p146 = scmp.ne.s32.totalorder %s129, %s145
    %p147 = scmp.eq.s32.totalorder %s16, 0
    %p148 = por %p146, %p147
    %p149 = scmp.le.s32.totalorder 1, %s10
    %p150 = scmp.lt.s32.totalorder %s10, 3
    %p151 = pnand %p149, %p150
    %p152 = pneg %p151
    // Predicated region
    $region9: #{leaky_relu_transpose_conv_block.3} parent=5 // pred_check
      _
    $region10: #{leaky_relu_transpose_conv_block.3} parent=5 // pred_check_branch
      %154 = sbr.rel (%p151) target = $region12
    $region11: #{leaky_relu_transpose_conv_block.3} parent=5 // pred_region
      %s155 = ssub.s32 %s10, 1
      // Predicated region
      $region13: #{leaky_relu_transpose_conv_block.3} parent=11 // pred_check
        %p156 = pneg %p71
      $region14: #{leaky_relu_transpose_conv_block.3} parent=11 // pred_check_branch
        %158 = sbr.rel (%p156) target = $region16
      $region15: #{leaky_relu_transpose_conv_block.3} parent=11 // pred_region
        _
      $region16: #{leaky_relu_transpose_conv_block.3} parent=11 // pred_fallthru
        _
      // Predicated region
      $region17: #{leaky_relu_transpose_conv_block.3} parent=11 // pred_check
        %p159 = pneg %p92
      $region18: #{leaky_relu_transpose_conv_block.3} parent=11 // pred_check_branch
        %161 = sbr.rel (%p159) target = $region20
      $region19: #{leaky_relu_transpose_conv_block.3} parent=11 // pred_region
        _
      $region20: #{leaky_relu_transpose_conv_block.3} parent=11 // pred_fallthru
        _
      // Predicated region
      $region21: #{leaky_relu_transpose_conv_block.3} parent=11 // pred_check
        %p162 = pneg %p113
      $region22: #{leaky_relu_transpose_conv_block.3} parent=11 // pred_check_branch
        %164 = sbr.rel (%p162) target = $region24
      $region23: #{leaky_relu_transpose_conv_block.3} parent=11 // pred_region
        _
      $region24: #{leaky_relu_transpose_conv_block.3} parent=11 // pred_fallthru
        _
    $region12: #{leaky_relu_transpose_conv_block.3} parent=5 // pred_fallthru
      _
    %p165 = scmp.lt.s32.totalorder %s10, 2
    // Predicated region
    $region25: #{leaky_relu_transpose_conv_block.3} parent=5 // pred_check
      %p166 = pneg %p165
    $region26: #{leaky_relu_transpose_conv_block.3} parent=5 // pred_check_branch
      %168 = sbr.rel (%p166) target = $region28
    $region27: #{leaky_relu_transpose_conv_block.3} parent=5 // pred_region
      // Predicated region
      $region29: #{leaky_relu_transpose_conv_block.3} parent=27 // pred_check
        %p169 = pneg %p44
      $region30: #{leaky_relu_transpose_conv_block.3} parent=27 // pred_check_branch
        %171 = sbr.rel (%p169) target = $region32
      $region31: #{leaky_relu_transpose_conv_block.3} parent=27 // pred_region
        %s172 = smul.u32 2, %s18
        %p173 = scmp.lt.s32.totalorder %s17, 1
        %s174 = scalar_select %p173, %s17, 1
        %p175 = scmp.lt.s32.totalorder %s172, 1
        %s176 = scalar_select %p175, %s172, 1
        %s177 = smul.addr %s174, 2
        %s178 = sadd.s32 %s176, %s177
        %s179 = smul.addr %s178, 4
        %s180 = scalar_lea.vmem %s0, %s179
        %s181 = smul.u32 2, %s18
      $region32: #{leaky_relu_transpose_conv_block.3} parent=27 // pred_fallthru
        _
    $region28: #{leaky_relu_transpose_conv_block.3} parent=5 // pred_fallthru
      _
    %p182 = scmp.le.s32.totalorder 1, %s10
    %p183 = scmp.lt.s32.totalorder %s10, 3
    %p184 = pnand %p182, %p183
    %p185 = pneg %p184
    // Predicated region
    $region33: #{leaky_relu_transpose_conv_block.3} parent=5 // pred_check
      _
    $region34: #{leaky_relu_transpose_conv_block.3} parent=5 // pred_check_branch
      %187 = sbr.rel (%p184) target = $region36
    $region35: #{leaky_relu_transpose_conv_block.3} parent=5 // pred_region
      %s188 = ssub.s32 %s10, 1
      %s189 = smul.u32 2, %s20
      %p190 = scmp.lt.s32.totalorder %s19, 1
      %s191 = scalar_select %p190, %s19, 1
      %p192 = scmp.lt.s32.totalorder %s189, 1
      %s193 = scalar_select %p192, %s189, 1
      %s194 = smul.addr %s191, 2
      %s195 = sadd.s32 %s193, %s194
      %s196 = smul.addr %s195, 4
      %s197 = scalar_lea.vmem %s0, %s196
      %p198 = pneg %p50
      %p199 = pneg %p47
      %p200 = pneg %p71
      %p201 = pneg %p68
      %p202 = pneg %p92
      %p203 = pneg %p89
      %p204 = pneg %p113
      %p205 = pneg %p110
      %p206 = pneg %p141
      %p207 = pneg %p138
      %s208 = smul.u32 2, %s20
      %p209 = scmp.lt.s32.totalorder %s19, 1
      %s210 = scalar_select %p209, %s19, 1
      %p211 = scmp.lt.s32.totalorder %s208, 1
      %s212 = scalar_select %p211, %s208, 1
      %s213 = smul.addr %s210, 18
      %s214 = sadd.s32 %s212, %s213
      %s215 = smul.addr %s214, 8
      %s216 = scalar_lea.vmem %s4, %s215
      %s217 = smul.u32 2, %s20
      %p218 = scmp.lt.s32.totalorder %s19, 1
      %s219 = scalar_select %p218, %s19, 1
      %p220 = scmp.lt.s32.totalorder %s217, 1
      %s221 = scalar_select %p220, %s217, 1
      %s222 = smul.addr %s219, 2
      %s223 = sadd.s32 %s221, %s222
      %s224 = smul.addr %s223, 4
      %s225 = scalar_lea.vmem %s0, %s224
      %s226 = smul.u32 2, %s20
      %s227 = smul.u32 2, %s20
      %p228 = scmp.lt.s32.totalorder %s19, 1
      %s229 = scalar_select %p228, %s19, 1
      %p230 = scmp.lt.s32.totalorder %s227, 1
      %s231 = scalar_select %p230, %s227, 1
      %s232 = smul.addr %s229, 18
      %s233 = sadd.s32 %s231, %s232
      %s234 = smul.addr %s233, 8
      %s235 = scalar_lea.vmem %s4, %s234
      %s236 = smul.u32 2, %s20
      %v237 = vld [vmem:[%s1] sm:$0xff]
      %v238 = vld [vmem:[%s1 + $0x8] sm:$0xff]
      %v239 = vld [vmem:[%s1 + $0x10] sm:$0xff]
      %v240 = vld [vmem:[%s1 + $0x18] sm:$0xff]
      %v241 = vld [vmem:[%s1 + $0x20] sm:$0xff]
      %v242 = vld [vmem:[%s1 + $0x28] sm:$0xff]
      %v243 = vld [vmem:[%s1 + $0x30] sm:$0xff]
      %v244 = vld [vmem:[%s1 + $0x38] sm:$0xff]
      %v245 = vld [vmem:[%s1 + $0x40] sm:$0xff]
      %v246 = vld [vmem:[%s225] sm:$0xff]
      %v248 = vcombine.high %v246, %v246
      %vm249 = vcmask 31744
      %v251 = vsel %vm249, %v237, 0
      %v254 = vsel %vm249, %v238, 0
      %v257 = vsel %vm249, %v239, 0
      %v260 = vsel %vm249, %v240, 0
      %v263 = vsel %vm249, %v241, 0
      %v266 = vsel %vm249, %v242, 0
      %v269 = vsel %vm249, %v243, 0
      %v272 = vsel %vm249, %v244, 0
      %v275 = vsel %vm249, %v245, 0
      %vm277 = vcmask 1043456
      %v278 = vsel %vm277, %v246, 0
      %v280 = vsel %vm277, %v248, 0
      %282 = vmatprep.subr.mxu0 %v280
      %283 = vmatpush1.msra.mxu0 %v278
      %284 = vmatprep.subr.mxu0 0.0
      %285 = vmatpush1.msra.mxu0 0.0
      %286 = vmatprep.subr.mxu0 0.0
      %287 = vmatpush1.msra.mxu0 0.0
      %288 = vmatprep.subr.mxu0 0.0
      %289 = vmatpush1.msra.mxu0 0.0
      %290 = vmatprep.subr.mxu0 0.0
      %291 = vmatpush1.msra.mxu0 0.0
      %292 = vmatprep.subr.mxu0 0.0
      %293 = vmatpush1.msra.mxu0 0.0
      %294 = vmatprep.subr.mxu0 0.0
      %295 = vmatpush1.msra.mxu0 0.0
      %296 = vmatprep.subr.mxu0 0.0
      %297 = vmatpush1.msra.mxu0 0.0
      %298 = vmatprep.subr.mxu0 0.0
      %299 = vmatpush1.msra.mxu0 0.0
      %300 = vmatprep.subr.mxu0 0.0
      %301 = vmatpush1.msra.mxu0 0.0
      %302 = vmatprep.subr.mxu0 0.0
      %303 = vmatpush1.msra.mxu0 0.0
      %304 = vmatprep.subr.mxu0 0.0
      %305 = vmatpush1.msra.mxu0 0.0
      %306 = vmatprep.subr.mxu0 0.0
      %307 = vmatpush1.msra.mxu0 0.0
      %308 = vmatprep.subr.mxu0 0.0
      %309 = vmatpush1.msra.mxu0 0.0
      %310 = vmatprep.subr.mxu0 0.0
      %311 = vmatpush1.msra.mxu0 0.0
      %312 = vmatprep.subr.mxu0 0.0
      %313 = vmatpush1.msra.mxu0 0.0
      %314 = vmatprep.subr.mxu0 0.0
      %315 = vmatpush1.msra.mxu0 0.0
      %316 = vmatprep.subr.mxu0 0.0
      %317 = vmatpush1.msra.mxu0 0.0
      %318 = vmatprep.subr.mxu0 0.0
      %319 = vmatpush1.msra.mxu0 0.0
      %320 = vmatprep.subr.mxu0 0.0
      %321 = vmatpush1.msra.mxu0 0.0
      %322 = vmatprep.subr.mxu0 0.0
      %323 = vmatpush1.msra.mxu0 0.0
      %324 = vmatprep.subr.mxu0 0.0
      %325 = vmatpush1.msra.mxu0 0.0
      %326 = vmatprep.subr.mxu0 0.0
      %327 = vmatpush1.msra.mxu0 0.0
      %328 = vmatprep.subr.mxu0 0.0
      %329 = vmatpush1.msra.mxu0 0.0
      %330 = vmatprep.subr.mxu0 0.0
      %331 = vmatpush1.msra.mxu0 0.0
      %332 = vmatprep.subr.mxu0 0.0
      %333 = vmatpush1.msra.mxu0 0.0
      %334 = vmatprep.subr.mxu0 0.0
      %335 = vmatpush1.msra.mxu0 0.0
      %336 = vmatprep.subr.mxu0 0.0
      %337 = vmatpush1.msra.mxu0 0.0
      %338 = vmatprep.subr.mxu0 0.0
      %339 = vmatpush1.msra.mxu0 0.0
      %340 = vmatprep.subr.mxu0 0.0
      %341 = vmatpush1.msra.mxu0 0.0
      %342 = vmatprep.subr.mxu0 0.0
      %343 = vmatpush1.msra.mxu0 0.0
      %344 = vmatprep.subr.mxu0 0.0
      %345 = vmatpush1.msra.mxu0 0.0
      %346 = vmatprep.mubr.f32.mxu0 0.0
      %347 = vmatmul.mubr.f32.gmra.mrb[0].mxu0 %v251
      %v348 = vpop.f32.mrb[0].mxu0
      %v349 = vadd.f32 0.0, %v348
      %v350 = vpop.f32.mrb[0].mxu0
      %v351 = vadd.f32 0.0, %v350
      %352 = vmatprep.mubr.f32.mxu0 0.0
      %353 = vmatmul.mubr.f32.gmra.mrb[0].mxu0 %v254
      %v354 = vpop.f32.mrb[0].mxu0
      %v355 = vadd.f32 0.0, %v354
      %v356 = vpop.f32.mrb[0].mxu0
      %v357 = vadd.f32 0.0, %v356
      %358 = vmatprep.mubr.f32.mxu0 0.0
      %359 = vmatmul.mubr.f32.gmra.mrb[0].mxu0 %v257
      %v360 = vpop.f32.mrb[0].mxu0
      %v361 = vadd.f32 0.0, %v360
      %v362 = vpop.f32.mrb[0].mxu0
      %v363 = vadd.f32 0.0, %v362
      %364 = vmatprep.mubr.f32.mxu0 0.0
      %365 = vmatmul.mubr.f32.gmra.mrb[0].mxu0 %v260
      %v366 = vpop.f32.mrb[0].mxu0
      %v367 = vadd.f32 0.0, %v366
      %v368 = vpop.f32.mrb[0].mxu0
      %v369 = vadd.f32 0.0, %v368
      %370 = vmatprep.mubr.f32.mxu0 0.0
      %371 = vmatmul.mubr.f32.gmra.mrb[0].mxu0 %v263
      %v372 = vpop.f32.mrb[0].mxu0
      %v373 = vadd.f32 0.0, %v372
      %v374 = vpop.f32.mrb[0].mxu0
      %v375 = vadd.f32 0.0, %v374
      %376 = vmatprep.mubr.f32.mxu0 0.0
      %377 = vmatmul.mubr.f32.gmra.mrb[0].mxu0 %v266
      %v378 = vpop.f32.mrb[0].mxu0
      %v379 = vadd.f32 0.0, %v378
      %v380 = vpop.f32.mrb[0].mxu0
      %v381 = vadd.f32 0.0, %v380
      %382 = vmatprep.mubr.f32.mxu0 0.0
      %383 = vmatmul.mubr.f32.gmra.mrb[0].mxu0 %v269
      %v384 = vpop.f32.mrb[0].mxu0
      %v385 = vadd.f32 0.0, %v384
      %v386 = vpop.f32.mrb[0].mxu0
      %v387 = vadd.f32 0.0, %v386
      %388 = vmatprep.mubr.f32.mxu0 0.0
      %389 = vmatmul.mubr.f32.gmra.mrb[0].mxu0 %v272
      %v390 = vpop.f32.mrb[0].mxu0
      %v391 = vadd.f32 0.0, %v390
      %v392 = vpop.f32.mrb[0].mxu0
      %v393 = vadd.f32 0.0, %v392
      %394 = vmatprep.mubr.f32.mxu0 0.0
      %395 = vmatmul.mubr.f32.gmra.mrb[0].mxu0 %v275
      %v396 = vpop.f32.mrb[0].mxu0
      %v397 = vadd.f32 0.0, %v396
      %v398 = vpop.f32.mrb[0].mxu0
      %v399 = vadd.f32 0.0, %v398
      %400 = vdwg.mxu0
      %v401 = vld [vmem:[%s2] sm:$0xff]
      %v402 = vld [vmem:[%s2 + $0x8] sm:$0xff]
      %v403 = vld [vmem:[%s2 + $0x10] sm:$0xff]
      %v404 = vld [vmem:[%s2 + $0x18] sm:$0xff]
      %v405 = vld [vmem:[%s2 + $0x20] sm:$0xff]
      %v406 = vld [vmem:[%s2 + $0x28] sm:$0xff]
      %v407 = vld [vmem:[%s2 + $0x30] sm:$0xff]
      %v408 = vld [vmem:[%s2 + $0x38] sm:$0xff]
      %v409 = vld [vmem:[%s2 + $0x40] sm:$0xff]
      %411 = vset.pattern.permute.xlu0 0
      %412 = vperm.xlu0 %411, %v401
      %v413 = vpop.permute.xlu0 %412
      %416 = vset.pattern.permute.xlu0 0
      %417 = vperm.xlu0 %416, %v402
      %v418 = vpop.permute.xlu0 %417
      %421 = vset.pattern.permute.xlu0 0
      %422 = vperm.xlu0 %421, %v403
      %v423 = vpop.permute.xlu0 %422
      %426 = vset.pattern.permute.xlu0 0
      %427 = vperm.xlu0 %426, %v404
      %v428 = vpop.permute.xlu0 %427
      %431 = vset.pattern.permute.xlu0 0
      %432 = vperm.xlu0 %431, %v405
      %v433 = vpop.permute.xlu0 %432
      %436 = vset.pattern.permute.xlu0 0
      %437 = vperm.xlu0 %436, %v406
      %v438 = vpop.permute.xlu0 %437
      %441 = vset.pattern.permute.xlu0 0
      %442 = vperm.xlu0 %441, %v407
      %v443 = vpop.permute.xlu0 %442
      %446 = vset.pattern.permute.xlu0 0
      %447 = vperm.xlu0 %446, %v408
      %v448 = vpop.permute.xlu0 %447
      %451 = vset.pattern.permute.xlu0 0
      %452 = vperm.xlu0 %451, %v409
      %v453 = vpop.permute.xlu0 %452
      %v455 = vmul.f32 %v349, %v413
      %v456 = vmul.f32 %v351, %v413
      %v457 = vmul.f32 %v355, %v418
      %v458 = vmul.f32 %v357, %v418
      %v459 = vmul.f32 %v361, %v423
      %v460 = vmul.f32 %v363, %v423
      %v461 = vmul.f32 %v367, %v428
      %v462 = vmul.f32 %v369, %v428
      %v463 = vmul.f32 %v373, %v433
      %v464 = vmul.f32 %v375, %v433
      %v465 = vmul.f32 %v379, %v438
      %v466 = vmul.f32 %v381, %v438
      %v467 = vmul.f32 %v385, %v443
      %v468 = vmul.f32 %v387, %v443
      %v469 = vmul.f32 %v391, %v448
      %v470 = vmul.f32 %v393, %v448
      %v471 = vmul.f32 %v397, %v453
      %v472 = vmul.f32 %v399, %v453
      %v473 = vld [vmem:[%s3] sm:$0xff]
      %v474 = vld [vmem:[%s3 + $0x8] sm:$0xff]
      %v475 = vld [vmem:[%s3 + $0x10] sm:$0xff]
      %v476 = vld [vmem:[%s3 + $0x18] sm:$0xff]
      %v477 = vld [vmem:[%s3 + $0x20] sm:$0xff]
      %v478 = vld [vmem:[%s3 + $0x28] sm:$0xff]
      %v479 = vld [vmem:[%s3 + $0x30] sm:$0xff]
      %v480 = vld [vmem:[%s3 + $0x38] sm:$0xff]
      %v481 = vld [vmem:[%s3 + $0x40] sm:$0xff]
      %483 = vset.pattern.permute.xlu0 0
      %484 = vperm.xlu0 %483, %v473
      %v485 = vpop.permute.xlu0 %484
      %488 = vset.pattern.permute.xlu0 0
      %489 = vperm.xlu0 %488, %v474
      %v490 = vpop.permute.xlu0 %489
      %493 = vset.pattern.permute.xlu0 0
      %494 = vperm.xlu0 %493, %v475
      %v495 = vpop.permute.xlu0 %494
      %498 = vset.pattern.permute.xlu0 0
      %499 = vperm.xlu0 %498, %v476
      %v500 = vpop.permute.xlu0 %499
      %503 = vset.pattern.permute.xlu0 0
      %504 = vperm.xlu0 %503, %v477
      %v505 = vpop.permute.xlu0 %504
      %508 = vset.pattern.permute.xlu0 0
      %509 = vperm.xlu0 %508, %v478
      %v510 = vpop.permute.xlu0 %509
      %513 = vset.pattern.permute.xlu0 0
      %514 = vperm.xlu0 %513, %v479
      %v515 = vpop.permute.xlu0 %514
      %518 = vset.pattern.permute.xlu0 0
      %519 = vperm.xlu0 %518, %v480
      %v520 = vpop.permute.xlu0 %519
      %523 = vset.pattern.permute.xlu0 0
      %524 = vperm.xlu0 %523, %v481
      %v525 = vpop.permute.xlu0 %524
      %v527 = vadd.f32 %v455, %v485
      %v528 = vadd.f32 %v456, %v485
      %v529 = vadd.f32 %v457, %v490
      %v530 = vadd.f32 %v458, %v490
      %v531 = vadd.f32 %v459, %v495
      %v532 = vadd.f32 %v460, %v495
      %v533 = vadd.f32 %v461, %v500
      %v534 = vadd.f32 %v462, %v500
      %v535 = vadd.f32 %v463, %v505
      %v536 = vadd.f32 %v464, %v505
      %v537 = vadd.f32 %v465, %v510
      %v538 = vadd.f32 %v466, %v510
      %v539 = vadd.f32 %v467, %v515
      %v540 = vadd.f32 %v468, %v515
      %v541 = vadd.f32 %v469, %v520
      %v542 = vadd.f32 %v470, %v520
      %v543 = vadd.f32 %v471, %v525
      %v544 = vadd.f32 %v472, %v525
      %vm545 = vcmp.ge.f32.partialorder %v527, 0.0
      %vm546 = vcmp.ge.f32.partialorder %v528, 0.0
      %vm547 = vcmp.ge.f32.partialorder %v529, 0.0
      %vm548 = vcmp.ge.f32.partialorder %v530, 0.0
      %vm549 = vcmp.ge.f32.partialorder %v531, 0.0
      %vm550 = vcmp.ge.f32.partialorder %v532, 0.0
      %vm551 = vcmp.ge.f32.partialorder %v533, 0.0
      %vm552 = vcmp.ge.f32.partialorder %v534, 0.0
      %vm553 = vcmp.ge.f32.partialorder %v535, 0.0
      %vm554 = vcmp.ge.f32.partialorder %v536, 0.0
      %vm555 = vcmp.ge.f32.partialorder %v537, 0.0
      %vm556 = vcmp.ge.f32.partialorder %v538, 0.0
      %vm557 = vcmp.ge.f32.partialorder %v539, 0.0
      %vm558 = vcmp.ge.f32.partialorder %v540, 0.0
      %vm559 = vcmp.ge.f32.partialorder %v541, 0.0
      %vm560 = vcmp.ge.f32.partialorder %v542, 0.0
      %vm561 = vcmp.ge.f32.partialorder %v543, 0.0
      %vm562 = vcmp.ge.f32.partialorder %v544, 0.0
      %v563 = vmul.f32 %v527, 0.2
      %v564 = vmul.f32 %v528, 0.2
      %v565 = vmul.f32 %v529, 0.2
      %v566 = vmul.f32 %v530, 0.2
      %v567 = vmul.f32 %v531, 0.2
      %v568 = vmul.f32 %v532, 0.2
      %v569 = vmul.f32 %v533, 0.2
      %v570 = vmul.f32 %v534, 0.2
      %v571 = vmul.f32 %v535, 0.2
      %v572 = vmul.f32 %v536, 0.2
      %v573 = vmul.f32 %v537, 0.2
      %v574 = vmul.f32 %v538, 0.2
      %v575 = vmul.f32 %v539, 0.2
      %v576 = vmul.f32 %v540, 0.2
      %v577 = vmul.f32 %v541, 0.2
      %v578 = vmul.f32 %v542, 0.2
      %v579 = vmul.f32 %v543, 0.2
      %v580 = vmul.f32 %v544, 0.2
      %v581 = vsel %vm545, %v527, %v563
      %v582 = vsel %vm546, %v528, %v564
      %v583 = vsel %vm547, %v529, %v565
      %v584 = vsel %vm548, %v530, %v566
      %v585 = vsel %vm549, %v531, %v567
      %v586 = vsel %vm550, %v532, %v568
      %v587 = vsel %vm551, %v533, %v569
      %v588 = vsel %vm552, %v534, %v570
      %v589 = vsel %vm553, %v535, %v571
      %v590 = vsel %vm554, %v536, %v572
      %v591 = vsel %vm555, %v537, %v573
      %v592 = vsel %vm556, %v538, %v574
      %v593 = vsel %vm557, %v539, %v575
      %v594 = vsel %vm558, %v540, %v576
      %v595 = vsel %vm559, %v541, %v577
      %v596 = vsel %vm560, %v542, %v578
      %v597 = vsel %vm561, %v543, %v579
      %v598 = vsel %vm562, %v544, %v580
      %599 = vst [vmem:[%s235] sm:$0xff] %v581
      %600 = vst [vmem:[%s235 + $0x8] sm:$0xff] %v582
      %601 = vst [vmem:[%s235 + $0x10] sm:$0xff] %v583
      %602 = vst [vmem:[%s235 + $0x18] sm:$0xff] %v584
      %603 = vst [vmem:[%s235 + $0x20] sm:$0xff] %v585
      %604 = vst [vmem:[%s235 + $0x28] sm:$0xff] %v586
      %605 = vst [vmem:[%s235 + $0x30] sm:$0xff] %v587
      %606 = vst [vmem:[%s235 + $0x38] sm:$0xff] %v588
      %607 = vst [vmem:[%s235 + $0x40] sm:$0xff] %v589
      %608 = vst [vmem:[%s235 + $0x48] sm:$0xff] %v590
      %609 = vst [vmem:[%s235 + $0x50] sm:$0xff] %v591
      %610 = vst [vmem:[%s235 + $0x58] sm:$0xff] %v592
      %611 = vst [vmem:[%s235 + $0x60] sm:$0xff] %v593
      %612 = vst [vmem:[%s235 + $0x68] sm:$0xff] %v594
      %613 = vst [vmem:[%s235 + $0x70] sm:$0xff] %v595
      %614 = vst [vmem:[%s235 + $0x78] sm:$0xff] %v596
      %615 = vst [vmem:[%s235 + $0x80] sm:$0xff] %v597
      %616 = vst [vmem:[%s235 + $0x88] sm:$0xff] %v598
      %s617 = smul.u32 2, %s20
      %p618 = scmp.lt.s32.totalorder %s19, 1
      %s619 = scalar_select %p618, %s19, 1
      %p620 = scmp.lt.s32.totalorder %s617, 1
      %s621 = scalar_select %p620, %s617, 1
      %s622 = smul.addr %s619, 18
      %s623 = sadd.s32 %s621, %s622
      %s624 = smul.addr %s623, 8
      %s625 = scalar_lea.vmem %s4, %s624
      // Predicated region
      $region37: #{leaky_relu_transpose_conv_block.3} parent=35 // pred_check
        %p626 = pneg %p138
      $region38: #{leaky_relu_transpose_conv_block.3} parent=35 // pred_check_branch
        %628 = sbr.rel (%p626) target = $region40
      $region39: #{leaky_relu_transpose_conv_block.3} parent=35 // pred_region
        %s629 = smul.u32 2, %s20
      $region40: #{leaky_relu_transpose_conv_block.3} parent=35 // pred_fallthru
        _
    $region36: #{leaky_relu_transpose_conv_block.3} parent=5 // pred_fallthru
      _
    %p630 = scmp.le.s32.totalorder 2, %s10
    // Predicated region
    $region41: #{leaky_relu_transpose_conv_block.3} parent=5 // pred_check
      %p631 = pneg %p630
    $region42: #{leaky_relu_transpose_conv_block.3} parent=5 // pred_check_branch
      %633 = sbr.rel (%p631) target = $region44
    $region43: #{leaky_relu_transpose_conv_block.3} parent=5 // pred_region
      %s634 = ssub.s32 %s10, 2
      // Predicated region
      $region45: #{leaky_relu_transpose_conv_block.3} parent=43 // pred_check
        %p635 = pneg %p144
      $region46: #{leaky_relu_transpose_conv_block.3} parent=43 // pred_check_branch
        %637 = sbr.rel (%p635) target = $region48
      $region47: #{leaky_relu_transpose_conv_block.3} parent=43 // pred_region
        %s638 = smul.u32 2, %s22
        %p639 = scmp.lt.s32.totalorder %s21, 1
        %s640 = scalar_select %p639, %s21, 1
        %p641 = scmp.lt.s32.totalorder %s638, 1
        %s642 = scalar_select %p641, %s638, 1
        %s643 = smul.addr %s640, 18
        %s644 = sadd.s32 %s642, %s643
        %s645 = smul.addr %s644, 8
        %s646 = scalar_lea.vmem %s4, %s645
      $region48: #{leaky_relu_transpose_conv_block.3} parent=43 // pred_fallthru
        _
    $region44: #{leaky_relu_transpose_conv_block.3} parent=5 // pred_fallthru
      _
  $region6: #{leaky_relu_transpose_conv_block.3} parent=0 // loop_footer
    %s14 = sadd.s32 1, %s10
  $region7: #{leaky_relu_transpose_conv_block.3} parent=0 // loop_footer_branch
    %9 = sbr.rel target = $region3
  $region8: #{leaky_relu_transpose_conv_block.3} parent=0 // loop_exit
    _

</llo_original>
